<compile_context>
chip_gen: v5e
topology: v5e:2x2
jax: 0.10.0
libtpu: 0.0.40
codegen_flags: <defaults>
</compile_context>

<pallas_src>
import functools

import numpy as np
import jax
import jax.numpy as jnp
from jax import lax
from jax.experimental import pallas as pl
from jax.experimental.pallas import tpu as pltpu  # noqa: F401  (TPU backend)


EMBED_DIM = 32
NUM_HEADS = 8
HEAD_DIM = EMBED_DIM // NUM_HEADS


# ----------------------------------------------------------------------------
# Fused kernel: whole MHA forward in one grid-less pallas_call
# ----------------------------------------------------------------------------
def fused_mha_kernel(xq_ref, xkv_ref, wq_ref, wkv_ref, bq_ref, bkv_ref,
                     wo_ref, bo_ref, hmask_ref, segones_ref, avg_ref,
                     out_ref, attnw_ref, *, num_heads):
    """Fully fused MHA forward for key == value, native torch layouts.

    xq_ref     : (L, N, E)   query  (batch_first=False layout)
    xkv_ref    : (S, N, E)   key (= value)
    wq_ref     : (E, E)      Wq^T * 1/sqrt(hd)     bq_ref  : (1, E)  (scaled)
    wkv_ref    : (E, 2E)     [Wk; Wv]^T            bkv_ref : (1, 2E)
    wo_ref     : (E, E)      Wo^T                  bo_ref  : (1, E)
    hmask_ref  : (H*S, E)    block-diagonal head mask
    segones_ref: (H*S, H*S)  per-segment summation matrix
    avg_ref    : (H*S, S)    head-averaging matrix (already / H)
    out_ref    : (L, N, E)   attention output (torch layout)
    attnw_ref  : (N, L, S)   head-averaged attention weights
    """
    L, N, E = xq_ref.shape
    S = xkv_ref.shape[0]
    H = num_heads

    wq = wq_ref[...]
    wkv = wkv_ref[...]
    bq = bq_ref[...]
    bkv = bkv_ref[...]
    wo = wo_ref[...]
    bo = bo_ref[...]
    head_mask = hmask_ref[...]     # (H*S, E)
    seg_ones = segones_ref[...]    # (H*S, H*S)
    avg_mat = avg_ref[...]         # (H*S, S)

    xq = xq_ref[...]               # (L, N, E)
    xkv = xkv_ref[...]             # (S, N, E)

    # ---- batched in-projections: one q dot, one packed [k|v] dot ----------
    xq_rows = jnp.concatenate([xq[:, n, :] for n in range(N)], axis=0)    # (N*L, E)
    xkv_rows = jnp.concatenate([xkv[:, n, :] for n in range(N)], axis=0)  # (N*S, E)
    q_all = jnp.dot(xq_rows, wq, preferred_element_type=jnp.float32) + bq      # pre-scaled
    kv_all = jnp.dot(xkv_rows, wkv, preferred_element_type=jnp.float32) + bkv  # (N*S, 2E)

    ctx_list = []
    w_list = []
    for n in range(N):                         # unrolled, N is tiny
        q_n = q_all[n * L:(n + 1) * L, :]      # (L, E)
        k_n = kv_all[n * S:(n + 1) * S, :E]    # (S, E)
        v_n = kv_all[n * S:(n + 1) * S, E:]    # (S, E)

        # block-diagonal K / V: head h occupies rows h*S:(h+1)*S and columns
        # h*hd:(h+1)*hd; everything else is zero.
        k_bd = jnp.concatenate([k_n] * H, axis=0) * head_mask    # (H*S, E)
        v_bd = jnp.concatenate([v_n] * H, axis=0) * head_mask    # (H*S, E)

        # all-head scores in one lane-dense dot (contract last dims, no .T)
        s_all = lax.dot_general(q_n, k_bd, (((1,), (1,)), ((), ())),
                                preferred_element_type=jnp.float32)  # (L, H*S)

        # single row max over all heads: upper-bounds each segment max, so the
        # per-segment softmax below is still exact.
        m = jnp.max(s_all, axis=-1, keepdims=True)
        e = jnp.exp(s_all - m)
        # per-segment sums broadcast to every lane via one MXU op
        denom = jnp.dot(e, seg_ones, preferred_element_type=jnp.float32)
        p = e / denom                                             # exact softmax

        # context with heads already merged (no concatenate over heads)
        ctx_list.append(jnp.dot(p, v_bd, preferred_element_type=jnp.float32))   # (L, E)
        # head-averaged attention weights
        w_list.append(jnp.dot(p, avg_mat, preferred_element_type=jnp.float32))  # (L, S)

    # ---- batched out-projection + one store per output ---------------------
    ctx_all = jnp.concatenate(ctx_list, axis=0)                                 # (N*L, E)
    out_all = jnp.dot(ctx_all, wo, preferred_element_type=jnp.float32) + bo     # (N*L, E)
    out_lne = jnp.stack([out_all[n * L:(n + 1) * L, :] for n in range(N)],
                        axis=1)                                                 # (L, N, E)
    out_ref[...] = out_lne.astype(out_ref.dtype)
    attnw_ref[...] = jnp.stack(w_list, axis=0).astype(attnw_ref.dtype)          # (N, L, S)


def _full_spec(shape):
    zeros = (0,) * len(shape)
    return pl.BlockSpec(shape, lambda *args: zeros)


def _attention_masks(S, H, hd):
    """Tiny constant helper matrices for the block-diagonal attention."""
    E = H * hd
    HS = H * S
    r = np.arange(HS)
    head_mask = (r[:, None] // S == np.arange(E)[None, :] // hd).astype(np.float32)
    seg_ones = (r[:, None] // S == r[None, :] // S).astype(np.float32)
    avg_mat = ((r[:, None] % S) == np.arange(S)[None, :]).astype(np.float32) / H
    return jnp.asarray(head_mask), jnp.asarray(seg_ones), jnp.asarray(avg_mat)


def fused_mha(xq, xkv, kparams):
    """xq: (L, N, E) query, xkv: (S, N, E) key=value (torch layouts).
    Returns (attn_output (L, N, E), attn_weights (N, L, S))."""
    L, N, E = xq.shape
    S = xkv.shape[0]
    head_mask, seg_ones, avg_mat = _attention_masks(S, NUM_HEADS, HEAD_DIM)
    kern = functools.partial(fused_mha_kernel, num_heads=NUM_HEADS)
    return pl.pallas_call(
        kern,
        out_shape=(
            jax.ShapeDtypeStruct((L, N, E), jnp.float32),
            jax.ShapeDtypeStruct((N, L, S), jnp.float32),
        ),
        in_specs=[
            _full_spec((L, N, E)),
            _full_spec((S, N, E)),
            _full_spec(kparams["wq_t"].shape),
            _full_spec(kparams["wkv_t"].shape),
            _full_spec(kparams["bq"].shape),
            _full_spec(kparams["bkv"].shape),
            _full_spec(kparams["wo_t"].shape),
            _full_spec(kparams["bo"].shape),
            _full_spec(head_mask.shape),
            _full_spec(seg_ones.shape),
            _full_spec(avg_mat.shape),
        ],
        out_specs=(
            _full_spec((L, N, E)),
            _full_spec((N, L, S)),
        ),
    )(xq, xkv, kparams["wq_t"], kparams["wkv_t"], kparams["bq"],
      kparams["bkv"], kparams["wo_t"], kparams["bo"],
      head_mask, seg_ones, avg_mat)


# ----------------------------------------------------------------------------
# Model wrapper: MultiheadAttention(32, 8), batch_first=False, key == value
# ----------------------------------------------------------------------------
def init_params(key):
    """Torch-style MHA parameters."""
    k1, k2, k3, k4 = jax.random.split(key, 4)
    in_proj_w = jax.random.normal(k1, (3 * EMBED_DIM, EMBED_DIM), jnp.float32) * 0.1
    in_proj_b = jax.random.normal(k2, (3 * EMBED_DIM,), jnp.float32) * 0.1
    out_proj_w = jax.random.normal(k3, (EMBED_DIM, EMBED_DIM), jnp.float32) * 0.1
    out_proj_b = jax.random.normal(k4, (EMBED_DIM,), jnp.float32) * 0.1
    return dict(in_proj_w=in_proj_w, in_proj_b=in_proj_b,
                out_proj_w=out_proj_w, out_proj_b=out_proj_b)


def prepare_kernel_params(params):
    """One-time weight re-layout: transpose, pack [k|v], and fold the
    1/sqrt(head_dim) softmax scale into the q projection."""
    E = EMBED_DIM
    scale = 1.0 / float(HEAD_DIM) ** 0.5
    return dict(
        wq_t=jnp.asarray(params["in_proj_w"][:E].T) * scale,     # (E, E), pre-scaled
        wkv_t=jnp.asarray(params["in_proj_w"][E:].T),            # (E, 2E) = [Wk; Wv]^T
        bq=params["in_proj_b"][:E].reshape(1, E) * scale,        # (1, E),  pre-scaled
        bkv=params["in_proj_b"][E:].reshape(1, 2 * E),           # (1, 2E)
        wo_t=jnp.asarray(params["out_proj_w"].T),                # (E, E)
        bo=params["out_proj_b"].reshape(1, E),                   # (1, E)
    )


def model_forward(kparams, x1, x2):
    """Equivalent of Model.forward(x1, x2) = MHA(x1, x2, x2).
    x1: (L, N, E) query; x2: (S, N, E) key = value.
    Returns (attn_output (L, N, E), attn_weights (N, L, S)).
    No wrapper-side transposes: the kernel handles the torch layouts."""
    return fused_mha(x1, x2, kparams)


# ----------------------------------------------------------------------------
# Pure-JAX reference (torch MHA semantics) for sanity checking
# ----------------------------------------------------------------------------
def multihead_attention_ref(params, query, key, value):
    L, N, E = query.shape
    S = key.shape[0]
    H, hd = NUM_HEADS, HEAD_DIM
    wq, wk, wv = jnp.split(params["in_proj_w"], 3, axis=0)
    bq, bk, bv = jnp.split(params["in_proj_b"], 3, axis=0)
    q = query @ wq.T + bq
    k = key @ wk.T + bk
    v = value @ wv.T + bv
    q = q.reshape(L, N * H, hd).transpose(1, 0, 2) / float(hd) ** 0.5
    k = k.reshape(S, N * H, hd).transpose(1, 0, 2)
    v = v.reshape(S, N * H, hd).transpose(1, 0, 2)
    scores = jnp.einsum("bld,bsd->bls", q, k)
    p = jax.nn.softmax(scores, axis=-1)
    o = jnp.einsum("bls,bsd->bld", p, v)
    o = o.transpose(1, 0, 2).reshape(L, N, E)
    o = o @ params["out_proj_w"].T + params["out_proj_b"]
    return o, p.reshape(N, H, L, S).mean(axis=1)


if __name__ == "__main__":
    # small shapes consistent with the module: embed_dim=32, heads=8
    L, N, E = 8, 2, EMBED_DIM
    key0 = jax.random.PRNGKey(0)
    kx1, kx2, kp = jax.random.split(key0, 3)
    x1 = jax.random.normal(kx1, (L, N, E), jnp.float32)   # query (L, N, E)
    x2 = jax.random.normal(kx2, (L, N, E), jnp.float32)   # key = value

    params = init_params(kp)
    kparams = prepare_kernel_params(params)               # one-time re-layout

    fwd = jax.jit(model_forward)
    out, attn_w = fwd(kparams, x1, x2)
    out = jax.block_until_ready(out)
    attn_w = jax.block_until_ready(attn_w)

    ref_out, ref_w = multihead_attention_ref(params, x1, x2, x2)
    assert out.shape == (L, N, E)
    assert attn_w.shape == (N, L, L)
    assert jnp.allclose(out, ref_out, atol=1e-4, rtol=1e-4)
    assert jnp.allclose(attn_w, ref_w, atol=1e-4, rtol=1e-4)

    print("KERNEL_OK")
</pallas_src>

<mosaic_0001>
module attributes {stable_mosaic.version = 11 : i64} {
  func.func @fused_mha_kernel(%arg0: memref<8x2x32xf32, #tpu.memory_space<vmem>>, %arg1: memref<8x2x32xf32, #tpu.memory_space<vmem>>, %arg2: memref<32x32xf32, #tpu.memory_space<vmem>>, %arg3: memref<32x64xf32, #tpu.memory_space<vmem>>, %arg4: memref<1x32xf32, #tpu.memory_space<vmem>>, %arg5: memref<1x64xf32, #tpu.memory_space<vmem>>, %arg6: memref<32x32xf32, #tpu.memory_space<vmem>>, %arg7: memref<1x32xf32, #tpu.memory_space<vmem>>, %arg8: memref<64x32xf32, #tpu.memory_space<vmem>>, %arg9: memref<64x64xf32, #tpu.memory_space<vmem>>, %arg10: memref<64x8xf32, #tpu.memory_space<vmem>>, %arg11: memref<8x2x32xf32, #tpu.memory_space<vmem>>, %arg12: memref<2x8x8xf32, #tpu.memory_space<vmem>>) attributes {dimension_semantics = [], scalar_prefetch = 0 : i64, scratch_operands = 0 : i64, tpu.core_type = #tpu.core_type<tc>} {
    %c0 = arith.constant 0 : index
    %c0_0 = arith.constant 0 : index
    %0 = vector.load %arg2[%c0, %c0_0] : memref<32x32xf32, #tpu.memory_space<vmem>>, vector<32x32xf32>
    %c0_1 = arith.constant 0 : index
    %c0_2 = arith.constant 0 : index
    %1 = vector.load %arg3[%c0_1, %c0_2] : memref<32x64xf32, #tpu.memory_space<vmem>>, vector<32x64xf32>
    %c0_3 = arith.constant 0 : index
    %c0_4 = arith.constant 0 : index
    %2 = vector.load %arg4[%c0_3, %c0_4] : memref<1x32xf32, #tpu.memory_space<vmem>>, vector<1x32xf32>
    %c0_5 = arith.constant 0 : index
    %c0_6 = arith.constant 0 : index
    %3 = vector.load %arg5[%c0_5, %c0_6] : memref<1x64xf32, #tpu.memory_space<vmem>>, vector<1x64xf32>
    %c0_7 = arith.constant 0 : index
    %c0_8 = arith.constant 0 : index
    %4 = vector.load %arg6[%c0_7, %c0_8] : memref<32x32xf32, #tpu.memory_space<vmem>>, vector<32x32xf32>
    %c0_9 = arith.constant 0 : index
    %c0_10 = arith.constant 0 : index
    %5 = vector.load %arg7[%c0_9, %c0_10] : memref<1x32xf32, #tpu.memory_space<vmem>>, vector<1x32xf32>
    %c0_11 = arith.constant 0 : index
    %c0_12 = arith.constant 0 : index
    %6 = vector.load %arg8[%c0_11, %c0_12] : memref<64x32xf32, #tpu.memory_space<vmem>>, vector<64x32xf32>
    %c0_13 = arith.constant 0 : index
    %c0_14 = arith.constant 0 : index
    %7 = vector.load %arg9[%c0_13, %c0_14] : memref<64x64xf32, #tpu.memory_space<vmem>>, vector<64x64xf32>
    %c0_15 = arith.constant 0 : index
    %c0_16 = arith.constant 0 : index
    %8 = vector.load %arg10[%c0_15, %c0_16] : memref<64x8xf32, #tpu.memory_space<vmem>>, vector<64x8xf32>
    %c0_17 = arith.constant 0 : index
    %c0_18 = arith.constant 0 : index
    %c0_19 = arith.constant 0 : index
    %9 = vector.load %arg0[%c0_17, %c0_18, %c0_19] : memref<8x2x32xf32, #tpu.memory_space<vmem>>, vector<8x2x32xf32>
    %c0_20 = arith.constant 0 : index
    %c0_21 = arith.constant 0 : index
    %c0_22 = arith.constant 0 : index
    %10 = vector.load %arg1[%c0_20, %c0_21, %c0_22] : memref<8x2x32xf32, #tpu.memory_space<vmem>>, vector<8x2x32xf32>
    %11 = vector.extract_strided_slice %9 {offsets = [0, 0, 0], sizes = [8, 1, 32], strides = [1, 1, 1]} : vector<8x2x32xf32> to vector<8x1x32xf32>
    %12 = vector.shape_cast %11 : vector<8x1x32xf32> to vector<8x32xf32>
    %13 = vector.extract_strided_slice %9 {offsets = [0, 1, 0], sizes = [8, 1, 32], strides = [1, 1, 1]} : vector<8x2x32xf32> to vector<8x1x32xf32>
    %14 = vector.shape_cast %13 : vector<8x1x32xf32> to vector<8x32xf32>
    %15 = tpu.concatenate %12, %14 in 0 : vector<8x32xf32>, vector<8x32xf32> -> vector<16x32xf32>
    %16 = vector.extract_strided_slice %10 {offsets = [0, 0, 0], sizes = [8, 1, 32], strides = [1, 1, 1]} : vector<8x2x32xf32> to vector<8x1x32xf32>
    %17 = vector.shape_cast %16 : vector<8x1x32xf32> to vector<8x32xf32>
    %18 = vector.extract_strided_slice %10 {offsets = [0, 1, 0], sizes = [8, 1, 32], strides = [1, 1, 1]} : vector<8x2x32xf32> to vector<8x1x32xf32>
    %19 = vector.shape_cast %18 : vector<8x1x32xf32> to vector<8x32xf32>
    %20 = tpu.concatenate %17, %19 in 0 : vector<8x32xf32>, vector<8x32xf32> -> vector<16x32xf32>
    %cst = arith.constant dense<0.000000e+00> : vector<16x32xf32>
    %21 = tpu.matmul %15, %0, %cst {dimension_numbers = #tpu.dot_dimension_numbers<[1], [0], [0], [1], [0, 0, 1, 1], [], []>} : vector<16x32xf32>, vector<32x32xf32>, vector<16x32xf32> -> vector<16x32xf32>
    %22 = vector.broadcast %2 : vector<1x32xf32> to vector<16x32xf32>
    %23 = arith.addf %21, %22 : vector<16x32xf32>
    %cst_23 = arith.constant dense<0.000000e+00> : vector<16x64xf32>
    %24 = tpu.matmul %20, %1, %cst_23 {dimension_numbers = #tpu.dot_dimension_numbers<[1], [0], [0], [1], [0, 0, 1, 1], [], []>} : vector<16x32xf32>, vector<32x64xf32>, vector<16x64xf32> -> vector<16x64xf32>
    %25 = vector.broadcast %3 : vector<1x64xf32> to vector<16x64xf32>
    %26 = arith.addf %24, %25 : vector<16x64xf32>
    %27 = vector.extract_strided_slice %23 {offsets = [0, 0], sizes = [8, 32], strides = [1, 1]} : vector<16x32xf32> to vector<8x32xf32>
    %28 = vector.extract_strided_slice %26 {offsets = [0, 0], sizes = [8, 32], strides = [1, 1]} : vector<16x64xf32> to vector<8x32xf32>
    %29 = vector.extract_strided_slice %26 {offsets = [0, 32], sizes = [8, 32], strides = [1, 1]} : vector<16x64xf32> to vector<8x32xf32>
    %30 = tpu.concatenate %28, %28, %28, %28, %28, %28, %28, %28 in 0 : vector<8x32xf32>, vector<8x32xf32>, vector<8x32xf32>, vector<8x32xf32>, vector<8x32xf32>, vector<8x32xf32>, vector<8x32xf32>, vector<8x32xf32> -> vector<64x32xf32>
    %31 = arith.mulf %30, %6 : vector<64x32xf32>
    %32 = tpu.concatenate %29, %29, %29, %29, %29, %29, %29, %29 in 0 : vector<8x32xf32>, vector<8x32xf32>, vector<8x32xf32>, vector<8x32xf32>, vector<8x32xf32>, vector<8x32xf32>, vector<8x32xf32>, vector<8x32xf32> -> vector<64x32xf32>
    %33 = arith.mulf %32, %6 : vector<64x32xf32>
    %cst_24 = arith.constant dense<0.000000e+00> : vector<8x64xf32>
    %34 = tpu.matmul %27, %31, %cst_24 {dimension_numbers = #tpu.dot_dimension_numbers<[1], [1], [0], [0], [0, 0, 1, 0], [], []>} : vector<8x32xf32>, vector<64x32xf32>, vector<8x64xf32> -> vector<8x64xf32>
    %cst_25 = arith.constant dense<0xFF800000> : vector<8xf32>
    %35 = vector.multi_reduction <maximumf>, %34, %cst_25 [1] : vector<8x64xf32> to vector<8xf32>
    %36 = vector.shape_cast %35 : vector<8xf32> to vector<8x1xf32>
    %37 = vector.broadcast %36 : vector<8x1xf32> to vector<8x64xf32>
    %38 = arith.subf %34, %37 : vector<8x64xf32>
    %39 = math.exp %38 : vector<8x64xf32>
    %cst_26 = arith.constant dense<0.000000e+00> : vector<8x64xf32>
    %40 = tpu.matmul %39, %7, %cst_26 {dimension_numbers = #tpu.dot_dimension_numbers<[1], [0], [0], [1], [0, 0, 1, 1], [], []>} : vector<8x64xf32>, vector<64x64xf32>, vector<8x64xf32> -> vector<8x64xf32>
    %41 = arith.divf %39, %40 : vector<8x64xf32>
    %cst_27 = arith.constant dense<0.000000e+00> : vector<8x32xf32>
    %42 = tpu.matmul %41, %33, %cst_27 {dimension_numbers = #tpu.dot_dimension_numbers<[1], [0], [0], [1], [0, 0, 1, 1], [], []>} : vector<8x64xf32>, vector<64x32xf32>, vector<8x32xf32> -> vector<8x32xf32>
    %cst_28 = arith.constant dense<0.000000e+00> : vector<8x8xf32>
    %43 = tpu.matmul %41, %8, %cst_28 {dimension_numbers = #tpu.dot_dimension_numbers<[1], [0], [0], [1], [0, 0, 1, 1], [], []>} : vector<8x64xf32>, vector<64x8xf32>, vector<8x8xf32> -> vector<8x8xf32>
    %44 = vector.extract_strided_slice %23 {offsets = [8, 0], sizes = [8, 32], strides = [1, 1]} : vector<16x32xf32> to vector<8x32xf32>
    %45 = vector.extract_strided_slice %26 {offsets = [8, 0], sizes = [8, 32], strides = [1, 1]} : vector<16x64xf32> to vector<8x32xf32>
    %46 = vector.extract_strided_slice %26 {offsets = [8, 32], sizes = [8, 32], strides = [1, 1]} : vector<16x64xf32> to vector<8x32xf32>
    %47 = tpu.concatenate %45, %45, %45, %45, %45, %45, %45, %45 in 0 : vector<8x32xf32>, vector<8x32xf32>, vector<8x32xf32>, vector<8x32xf32>, vector<8x32xf32>, vector<8x32xf32>, vector<8x32xf32>, vector<8x32xf32> -> vector<64x32xf32>
    %48 = arith.mulf %47, %6 : vector<64x32xf32>
    %49 = tpu.concatenate %46, %46, %46, %46, %46, %46, %46, %46 in 0 : vector<8x32xf32>, vector<8x32xf32>, vector<8x32xf32>, vector<8x32xf32>, vector<8x32xf32>, vector<8x32xf32>, vector<8x32xf32>, vector<8x32xf32> -> vector<64x32xf32>
    %50 = arith.mulf %49, %6 : vector<64x32xf32>
    %cst_29 = arith.constant dense<0.000000e+00> : vector<8x64xf32>
    %51 = tpu.matmul %44, %48, %cst_29 {dimension_numbers = #tpu.dot_dimension_numbers<[1], [1], [0], [0], [0, 0, 1, 0], [], []>} : vector<8x32xf32>, vector<64x32xf32>, vector<8x64xf32> -> vector<8x64xf32>
    %cst_30 = arith.constant dense<0xFF800000> : vector<8xf32>
    %52 = vector.multi_reduction <maximumf>, %51, %cst_30 [1] : vector<8x64xf32> to vector<8xf32>
    %53 = vector.shape_cast %52 : vector<8xf32> to vector<8x1xf32>
    %54 = vector.broadcast %53 : vector<8x1xf32> to vector<8x64xf32>
    %55 = arith.subf %51, %54 : vector<8x64xf32>
    %56 = math.exp %55 : vector<8x64xf32>
    %cst_31 = arith.constant dense<0.000000e+00> : vector<8x64xf32>
    %57 = tpu.matmul %56, %7, %cst_31 {dimension_numbers = #tpu.dot_dimension_numbers<[1], [0], [0], [1], [0, 0, 1, 1], [], []>} : vector<8x64xf32>, vector<64x64xf32>, vector<8x64xf32> -> vector<8x64xf32>
    %58 = arith.divf %56, %57 : vector<8x64xf32>
    %cst_32 = arith.constant dense<0.000000e+00> : vector<8x32xf32>
    %59 = tpu.matmul %58, %50, %cst_32 {dimension_numbers = #tpu.dot_dimension_numbers<[1], [0], [0], [1], [0, 0, 1, 1], [], []>} : vector<8x64xf32>, vector<64x32xf32>, vector<8x32xf32> -> vector<8x32xf32>
    %cst_33 = arith.constant dense<0.000000e+00> : vector<8x8xf32>
    %60 = tpu.matmul %58, %8, %cst_33 {dimension_numbers = #tpu.dot_dimension_numbers<[1], [0], [0], [1], [0, 0, 1, 1], [], []>} : vector<8x64xf32>, vector<64x8xf32>, vector<8x8xf32> -> vector<8x8xf32>
    %61 = tpu.concatenate %42, %59 in 0 : vector<8x32xf32>, vector<8x32xf32> -> vector<16x32xf32>
    %cst_34 = arith.constant dense<0.000000e+00> : vector<16x32xf32>
    %62 = tpu.matmul %61, %4, %cst_34 {dimension_numbers = #tpu.dot_dimension_numbers<[1], [0], [0], [1], [0, 0, 1, 1], [], []>} : vector<16x32xf32>, vector<32x32xf32>, vector<16x32xf32> -> vector<16x32xf32>
    %63 = vector.broadcast %5 : vector<1x32xf32> to vector<16x32xf32>
    %64 = arith.addf %62, %63 : vector<16x32xf32>
    %65 = vector.extract_strided_slice %64 {offsets = [0, 0], sizes = [8, 32], strides = [1, 1]} : vector<16x32xf32> to vector<8x32xf32>
    %66 = vector.extract_strided_slice %64 {offsets = [8, 0], sizes = [8, 32], strides = [1, 1]} : vector<16x32xf32> to vector<8x32xf32>
    %67 = vector.shape_cast %65 : vector<8x32xf32> to vector<8x1x32xf32>
    %68 = vector.shape_cast %66 : vector<8x32xf32> to vector<8x1x32xf32>
    %69 = tpu.concatenate %67, %68 in 1 : vector<8x1x32xf32>, vector<8x1x32xf32> -> vector<8x2x32xf32>
    %c0_35 = arith.constant 0 : index
    %c0_36 = arith.constant 0 : index
    %c0_37 = arith.constant 0 : index
    %70 = vector.load %arg11[%c0_35, %c0_36, %c0_37] : memref<8x2x32xf32, #tpu.memory_space<vmem>>, vector<8x2x32xf32>
    tpu.vector_store %arg11[%c0_35, %c0_36, %c0_37], %69 {strides = array<i32>} : memref<8x2x32xf32, #tpu.memory_space<vmem>>, vector<8x2x32xf32>,
    %71 = vector.shape_cast %43 : vector<8x8xf32> to vector<1x8x8xf32>
    %72 = vector.shape_cast %60 : vector<8x8xf32> to vector<1x8x8xf32>
    %73 = tpu.concatenate %71, %72 in 0 : vector<1x8x8xf32>, vector<1x8x8xf32> -> vector<2x8x8xf32>
    %c0_38 = arith.constant 0 : index
    %c0_39 = arith.constant 0 : index
    %c0_40 = arith.constant 0 : index
    %74 = vector.load %arg12[%c0_38, %c0_39, %c0_40] : memref<2x8x8xf32, #tpu.memory_space<vmem>>, vector<2x8x8xf32>
    tpu.vector_store %arg12[%c0_38, %c0_39, %c0_40], %73 {strides = array<i32>} : memref<2x8x8xf32, #tpu.memory_space<vmem>>, vector<2x8x8xf32>,
    return
  }
}

</mosaic_0001>

<llo_original>
// kernel: model_forward.1
$region0: #{model_forward.1}
  #allocation0 [shape = 'u32[]', space=smem, size = 0x4, offset = 0x4, fixed_abs, tag = 'smem constant byte address 0x4 - core index']
  #allocation1 [shape = 'u32[72,128]{1,0:T(1,128)}', space=vmem, size = 0x9000, scoped, tag = 'internal scratch']
  %s0 = inlined_call_operand.hbm [shape: f32[8,2,32], index: 0, kind: input, shape index: {}]
  %s1 = inlined_call_operand.hbm [shape: f32[8,2,32], index: 1, kind: input, shape index: {}]
  %s2 = inlined_call_operand.hbm [shape: f32[32,32], index: 2, kind: input, shape index: {}]
  %s3 = inlined_call_operand.hbm [shape: f32[32,64], index: 3, kind: input, shape index: {}]
  %s4 = inlined_call_operand.vmem [shape: f32[1,32], index: 4, kind: input, shape index: {}]
  %s5 = inlined_call_operand.hbm [shape: f32[1,64], index: 5, kind: input, shape index: {}]
  %s6 = inlined_call_operand.hbm [shape: f32[32,32], index: 6, kind: input, shape index: {}]
  %s7 = inlined_call_operand.hbm [shape: f32[1,32], index: 7, kind: input, shape index: {}]
  %s8 = inlined_call_operand.hbm [shape: f32[64,32], index: 8, kind: input, shape index: {}]
  %s9 = inlined_call_operand.hbm [shape: f32[64,64], index: 9, kind: input, shape index: {}]
  %s10 = inlined_call_operand.hbm [shape: f32[64,8], index: 10, kind: input, shape index: {}]
  %s11 = inlined_call_operand.hbm [shape: f32[8,2,32], index: 11, kind: output, shape index: {0}]
  %s12 = inlined_call_operand.hbm [shape: f32[2,8,8], index: 12, kind: output, shape index: {1}]
  %13 = xla_tuple %s11, %s12
  %s14 = sld [smem:[#allocation0]]
  $region102: #{model_forward.1} parent=0
    _
  %s16 = ssub.s32 1, %s14
  %s17 = scalar_select 0, %s16, %s14
  $region1: #{model_forward.1} parent=0
    #allocation2 [shape = 'u8[8192]{0}', space=vmem, size = 0x2000, scoped, tag = 'input window, operand 0, single buffered']
    #allocation3 [shape = 's32[1]{0}', space=sflag, size = 0x4, scoped, tag = 'scoped memory for model_forward.1']
    #allocation4 [shape = 's32[1]{0}', space=sflag, size = 0x4, scoped, tag = 'scoped memory for model_forward.1']
    #allocation5 [shape = 'u8[8192]{0}', space=vmem, size = 0x2000, scoped, tag = 'input window, operand 1, single buffered']
    #allocation6 [shape = 's32[1]{0}', space=sflag, size = 0x4, scoped, tag = 'scoped memory for model_forward.1']
    #allocation7 [shape = 'u8[16384]{0}', space=vmem, size = 0x4000, scoped, tag = 'input window, operand 2, single buffered']
    #allocation8 [shape = 'u8[16384]{0}', space=vmem, size = 0x4000, scoped, tag = 'input window, operand 3, single buffered']
    #allocation9 [shape = 's32[1]{0}', space=sflag, size = 0x4, scoped, tag = 'scoped memory for model_forward.1']
    #allocation10 [shape = 'u8[512]{0}', space=vmem, size = 0x400, scoped, tag = 'input window, operand 5, single buffered']
    #allocation11 [shape = 'u8[16384]{0}', space=vmem, size = 0x4000, scoped, tag = 'input window, operand 6, single buffered']
    #allocation12 [shape = 's32[1]{0}', space=sflag, size = 0x4, scoped, tag = 'scoped memory for model_forward.1']
    #allocation13 [shape = 'u8[512]{0}', space=vmem, size = 0x400, scoped, tag = 'input window, operand 7, single buffered']
    #allocation14 [shape = 'u8[32768]{0}', space=vmem, size = 0x8000, scoped, tag = 'input window, operand 8, single buffered']
    #allocation15 [shape = 's32[1]{0}', space=sflag, size = 0x4, scoped, tag = 'scoped memory for model_forward.1']
    #allocation16 [shape = 'u8[32768]{0}', space=vmem, size = 0x8000, scoped, tag = 'input window, operand 9, single buffered']
    #allocation17 [shape = 'u8[32768]{0}', space=vmem, size = 0x8000, scoped, tag = 'input window, operand 10, single buffered']
    #allocation18 [shape = 's32[1]{0}', space=sflag, size = 0x4, scoped, tag = 'scoped memory for model_forward.1']
    #allocation19 [shape = 'u8[8192]{0}', space=vmem, size = 0x2000, scoped, tag = 'output window, operand 0, single buffered']
    #allocation20 [shape = 'u8[8192]{0}', space=vmem, size = 0x2000, scoped, tag = 'output window, operand 1, single buffered']
    #allocation21 [shape = 's32[1]{0}', space=sflag, size = 0x4, scoped, tag = 'scoped memory for model_forward.1']
    %18 = vsyncpa [#allocation3], 0
    %19 = vsyncpa [#allocation6], 0
    %20 = vsyncpa [#allocation9], 0
    %21 = vsyncpa [#allocation12], 0
    %22 = vsyncpa [#allocation15], 0
    %23 = vsyncpa [#allocation18], 0
    %24 = vsyncpa [#allocation4], 0
    %25 = vsyncpa [#allocation21], 0
    // Predicated region
    $region2: #{model_forward.1} parent=1 // pred_check
      _
    $region3: #{model_forward.1} parent=1 // pred_check_branch
      %27 = sbr.rel (0) target = $region5
    $region4: #{model_forward.1} parent=1 // pred_region
      %29 = vsyncadd [#allocation3], 0
      %s30 = sshll.u32 %s0, 4
      %s31 = int_to_ptr.hbm [resolvable:$true] %s30
      %s32 = sshll.u32 [#allocation2], 4
      %s33 = int_to_ptr.vmem [resolvable:$true] %s32
      %38 = dma.hbm_to_vmem [thread:$0]  %s31, 256, %s33, [#allocation3], 32, 32, 2
    $region5: #{model_forward.1} parent=1 // pred_fallthru
      _
    // Predicated region
    $region6: #{model_forward.1} parent=1 // pred_check
      _
    $region7: #{model_forward.1} parent=1 // pred_check_branch
      %40 = sbr.rel (0) target = $region9
    $region8: #{model_forward.1} parent=1 // pred_region
      %42 = vsyncadd [#allocation6], 0
      %s43 = sshll.u32 %s1, 4
      %s44 = int_to_ptr.hbm [resolvable:$true] %s43
      %s45 = sshll.u32 [#allocation5], 4
      %s46 = int_to_ptr.vmem [resolvable:$true] %s45
      %51 = dma.hbm_to_vmem [thread:$0]  %s44, 256, %s46, [#allocation6], 32, 32, 2
    $region9: #{model_forward.1} parent=1 // pred_fallthru
      _
    // Predicated region
    $region10: #{model_forward.1} parent=1 // pred_check
      _
    $region11: #{model_forward.1} parent=1 // pred_check_branch
      %53 = sbr.rel (0) target = $region13
    $region12: #{model_forward.1} parent=1 // pred_region
      %55 = vsyncadd [#allocation6], 0
      %s56 = sshll.u32 %s2, 4
      %s57 = int_to_ptr.hbm [resolvable:$true] %s56
      %s58 = sshll.u32 [#allocation7], 4
      %s59 = int_to_ptr.vmem [resolvable:$true] %s58
      %64 = dma.hbm_to_vmem [thread:$0]  %s57, 512, %s59, [#allocation6], 128, 128, 8
    $region13: #{model_forward.1} parent=1 // pred_fallthru
      _
    // Predicated region
    $region14: #{model_forward.1} parent=1 // pred_check
      _
    $region15: #{model_forward.1} parent=1 // pred_check_branch
      %66 = sbr.rel (0) target = $region17
    $region16: #{model_forward.1} parent=1 // pred_region
      %68 = vsyncadd [#allocation9], 0
      %s69 = sshll.u32 %s3, 4
      %s70 = int_to_ptr.hbm [resolvable:$true] %s69
      %s71 = sshll.u32 [#allocation8], 4
      %s72 = int_to_ptr.vmem [resolvable:$true] %s71
      %77 = dma.hbm_to_vmem [thread:$0]  %s70, 512, %s72, [#allocation9], 128, 128, 8
    $region17: #{model_forward.1} parent=1 // pred_fallthru
      _
    // Predicated region
    $region18: #{model_forward.1} parent=1 // pred_check
      _
    $region19: #{model_forward.1} parent=1 // pred_check_branch
      %79 = sbr.rel (0) target = $region21
    $region20: #{model_forward.1} parent=1 // pred_region
      _
    $region21: #{model_forward.1} parent=1 // pred_fallthru
      _
    // Predicated region
    $region22: #{model_forward.1} parent=1 // pred_check
      _
    $region23: #{model_forward.1} parent=1 // pred_check_branch
      %81 = sbr.rel (0) target = $region25
    $region24: #{model_forward.1} parent=1 // pred_region
      %83 = vsyncadd [#allocation9], 0
      %s85 = sshll.u32 %s5, 4
      %s86 = int_to_ptr.hbm [resolvable:$true] %s85
      %s87 = sshll.u32 [#allocation10], 4
      %s88 = int_to_ptr.vmem [resolvable:$true] %s87
      %90 = dma.hbm_to_vmem [thread:$0]  %s86, 16, %s88, [#allocation9]
    $region25: #{model_forward.1} parent=1 // pred_fallthru
      _
    // Predicated region
    $region26: #{model_forward.1} parent=1 // pred_check
      _
    $region27: #{model_forward.1} parent=1 // pred_check_branch
      %92 = sbr.rel (0) target = $region29
    $region28: #{model_forward.1} parent=1 // pred_region
      %94 = vsyncadd [#allocation12], 0
      %s95 = sshll.u32 %s6, 4
      %s96 = int_to_ptr.hbm [resolvable:$true] %s95
      %s97 = sshll.u32 [#allocation11], 4
      %s98 = int_to_ptr.vmem [resolvable:$true] %s97
      %103 = dma.hbm_to_vmem [thread:$0]  %s96, 512, %s98, [#allocation12], 128, 128, 8
    $region29: #{model_forward.1} parent=1 // pred_fallthru
      _
    // Predicated region
    $region30: #{model_forward.1} parent=1 // pred_check
      _
    $region31: #{model_forward.1} parent=1 // pred_check_branch
      %105 = sbr.rel (0) target = $region33
    $region32: #{model_forward.1} parent=1 // pred_region
      %107 = vsyncadd [#allocation12], 0
      %s109 = sshll.u32 %s7, 4
      %s110 = int_to_ptr.hbm [resolvable:$true] %s109
      %s111 = sshll.u32 [#allocation13], 4
      %s112 = int_to_ptr.vmem [resolvable:$true] %s111
      %114 = dma.hbm_to_vmem [thread:$0]  %s110, 16, %s112, [#allocation12]
    $region33: #{model_forward.1} parent=1 // pred_fallthru
      _
    // Predicated region
    $region34: #{model_forward.1} parent=1 // pred_check
      _
    $region35: #{model_forward.1} parent=1 // pred_check_branch
      %116 = sbr.rel (0) target = $region37
    $region36: #{model_forward.1} parent=1 // pred_region
      %118 = vsyncadd [#allocation15], 0
      %s119 = sshll.u32 %s8, 4
      %s120 = int_to_ptr.hbm [resolvable:$true] %s119
      %s121 = sshll.u32 [#allocation14], 4
      %s122 = int_to_ptr.vmem [resolvable:$true] %s121
      %127 = dma.hbm_to_vmem [thread:$0]  %s120, 1024, %s122, [#allocation15], 128, 128, 8
    $region37: #{model_forward.1} parent=1 // pred_fallthru
      _
    // Predicated region
    $region38: #{model_forward.1} parent=1 // pred_check
      _
    $region39: #{model_forward.1} parent=1 // pred_check_branch
      %129 = sbr.rel (0) target = $region41
    $region40: #{model_forward.1} parent=1 // pred_region
      %131 = vsyncadd [#allocation15], 0
      %s132 = sshll.u32 %s9, 4
      %s133 = int_to_ptr.hbm [resolvable:$true] %s132
      %s134 = sshll.u32 [#allocation16], 4
      %s135 = int_to_ptr.vmem [resolvable:$true] %s134
      %140 = dma.hbm_to_vmem [thread:$0]  %s133, 1024, %s135, [#allocation15], 128, 128, 8
    $region41: #{model_forward.1} parent=1 // pred_fallthru
      _
    // Predicated region
    $region42: #{model_forward.1} parent=1 // pred_check
      _
    $region43: #{model_forward.1} parent=1 // pred_check_branch
      %142 = sbr.rel (0) target = $region45
    $region44: #{model_forward.1} parent=1 // pred_region
      %144 = vsyncadd [#allocation18], 0
      %s145 = sshll.u32 %s10, 4
      %s146 = int_to_ptr.hbm [resolvable:$true] %s145
      %s147 = sshll.u32 [#allocation17], 4
      %s148 = int_to_ptr.vmem [resolvable:$true] %s147
      %153 = dma.hbm_to_vmem [thread:$0]  %s146, 1024, %s148, [#allocation18], 128, 128, 8
    $region45: #{model_forward.1} parent=1 // pred_fallthru
      _
    // Predicated region
    $region46: #{model_forward.1} parent=1 // pred_check
      _
    $region47: #{model_forward.1} parent=1 // pred_check_branch
      %155 = sbr.rel (0) target = $region49
    $region48: #{model_forward.1} parent=1 // pred_region
      %157 = dma.done [#allocation3], 256
    $region49: #{model_forward.1} parent=1 // pred_fallthru
      _
    // Predicated region
    $region50: #{model_forward.1} parent=1 // pred_check
      _
    $region51: #{model_forward.1} parent=1 // pred_check_branch
      %159 = sbr.rel (0) target = $region53
    $region52: #{model_forward.1} parent=1 // pred_region
      %161 = dma.done [#allocation6], 256
    $region53: #{model_forward.1} parent=1 // pred_fallthru
      _
    // Predicated region
    $region54: #{model_forward.1} parent=1 // pred_check
      _
    $region55: #{model_forward.1} parent=1 // pred_check_branch
      %163 = sbr.rel (0) target = $region57
    $region56: #{model_forward.1} parent=1 // pred_region
      %165 = dma.done [#allocation6], 512
    $region57: #{model_forward.1} parent=1 // pred_fallthru
      _
    // Predicated region
    $region58: #{model_forward.1} parent=1 // pred_check
      _
    $region59: #{model_forward.1} parent=1 // pred_check_branch
      %167 = sbr.rel (0) target = $region61
    $region60: #{model_forward.1} parent=1 // pred_region
      %169 = dma.done [#allocation9], 512
    $region61: #{model_forward.1} parent=1 // pred_fallthru
      _
    // Predicated region
    $region62: #{model_forward.1} parent=1 // pred_check
      _
    $region63: #{model_forward.1} parent=1 // pred_check_branch
      %171 = sbr.rel (0) target = $region65
    $region64: #{model_forward.1} parent=1 // pred_region
      %173 = dma.done [#allocation9], 16
    $region65: #{model_forward.1} parent=1 // pred_fallthru
      _
    // Predicated region
    $region66: #{model_forward.1} parent=1 // pred_check
      _
    $region67: #{model_forward.1} parent=1 // pred_check_branch
      %175 = sbr.rel (0) target = $region69
    $region68: #{model_forward.1} parent=1 // pred_region
      %177 = dma.done [#allocation12], 512
    $region69: #{model_forward.1} parent=1 // pred_fallthru
      _
    // Predicated region
    $region70: #{model_forward.1} parent=1 // pred_check
      _
    $region71: #{model_forward.1} parent=1 // pred_check_branch
      %179 = sbr.rel (0) target = $region73
    $region72: #{model_forward.1} parent=1 // pred_region
      %181 = dma.done [#allocation12], 16
    $region73: #{model_forward.1} parent=1 // pred_fallthru
      _
    // Predicated region
    $region74: #{model_forward.1} parent=1 // pred_check
      _
    $region75: #{model_forward.1} parent=1 // pred_check_branch
      %183 = sbr.rel (0) target = $region77
    $region76: #{model_forward.1} parent=1 // pred_region
      %185 = dma.done [#allocation15], 1024
    $region77: #{model_forward.1} parent=1 // pred_fallthru
      _
    // Predicated region
    $region78: #{model_forward.1} parent=1 // pred_check
      _
    $region79: #{model_forward.1} parent=1 // pred_check_branch
      %187 = sbr.rel (0) target = $region81
    $region80: #{model_forward.1} parent=1 // pred_region
      %189 = dma.done [#allocation15], 1024
    $region81: #{model_forward.1} parent=1 // pred_fallthru
      _
    // Predicated region
    $region82: #{model_forward.1} parent=1 // pred_check
      _
    $region83: #{model_forward.1} parent=1 // pred_check_branch
      %191 = sbr.rel (0) target = $region85
    $region84: #{model_forward.1} parent=1 // pred_region
      %193 = dma.done [#allocation18], 1024
    $region85: #{model_forward.1} parent=1 // pred_fallthru
      _
    %v194 = vld [vmem:[#allocation7] sm:$0xff]
    %v195 = vld [vmem:[#allocation7 + $0x8] sm:$0xff]
    %v196 = vld [vmem:[#allocation7 + $0x10] sm:$0xff]
    %v197 = vld [vmem:[#allocation7 + $0x18] sm:$0xff]
    %v198 = vld [vmem:[#allocation8] sm:$0xff]
    %v199 = vld [vmem:[#allocation8 + $0x8] sm:$0xff]
    %v200 = vld [vmem:[#allocation8 + $0x10] sm:$0xff]
    %v201 = vld [vmem:[#allocation8 + $0x18] sm:$0xff]
    %v202 = vld [vmem:[%s4] sm:$0x1]
    %v203 = vld [vmem:[#allocation10] sm:$0x1]
    %v204 = vld [vmem:[#allocation11] sm:$0xff]
    %v205 = vld [vmem:[#allocation11 + $0x8] sm:$0xff]
    %v206 = vld [vmem:[#allocation11 + $0x10] sm:$0xff]
    %v207 = vld [vmem:[#allocation11 + $0x18] sm:$0xff]
    %v208 = vld [vmem:[#allocation13] sm:$0x1]
    %v209 = vld [vmem:[#allocation14] sm:$0xff]
    %v210 = vld [vmem:[#allocation14 + $0x8] sm:$0xff]
    %v211 = vld [vmem:[#allocation14 + $0x10] sm:$0xff]
    %v212 = vld [vmem:[#allocation14 + $0x18] sm:$0xff]
    %v213 = vld [vmem:[#allocation14 + $0x20] sm:$0xff]
    %v214 = vld [vmem:[#allocation14 + $0x28] sm:$0xff]
    %v215 = vld [vmem:[#allocation14 + $0x30] sm:$0xff]
    %v216 = vld [vmem:[#allocation14 + $0x38] sm:$0xff]
    %v217 = vld [vmem:[#allocation16] sm:$0xff]
    %v218 = vld [vmem:[#allocation16 + $0x8] sm:$0xff]
    %v219 = vld [vmem:[#allocation16 + $0x10] sm:$0xff]
    %v220 = vld [vmem:[#allocation16 + $0x18] sm:$0xff]
    %v221 = vld [vmem:[#allocation16 + $0x20] sm:$0xff]
    %v222 = vld [vmem:[#allocation16 + $0x28] sm:$0xff]
    %v223 = vld [vmem:[#allocation16 + $0x30] sm:$0xff]
    %v224 = vld [vmem:[#allocation16 + $0x38] sm:$0xff]
    %v225 = vld [vmem:[#allocation17] sm:$0xff]
    %v226 = vld [vmem:[#allocation17 + $0x8] sm:$0xff]
    %v227 = vld [vmem:[#allocation17 + $0x10] sm:$0xff]
    %v228 = vld [vmem:[#allocation17 + $0x18] sm:$0xff]
    %v229 = vld [vmem:[#allocation17 + $0x20] sm:$0xff]
    %v230 = vld [vmem:[#allocation17 + $0x28] sm:$0xff]
    %v231 = vld [vmem:[#allocation17 + $0x30] sm:$0xff]
    %v232 = vld [vmem:[#allocation17 + $0x38] sm:$0xff]
    %v233 = vld [vmem:[#allocation2] sm:$0x3]
    %v234 = vld [vmem:[#allocation2 + $0x2] sm:$0x3]
    %v235 = vld [vmem:[#allocation2 + $0x4] sm:$0x3]
    %v236 = vld [vmem:[#allocation2 + $0x6] sm:$0x3]
    %v237 = vld [vmem:[#allocation2 + $0x8] sm:$0x3]
    %v238 = vld [vmem:[#allocation2 + $0xa] sm:$0x3]
    %v239 = vld [vmem:[#allocation2 + $0xc] sm:$0x3]
    %v240 = vld [vmem:[#allocation2 + $0xe] sm:$0x3]
    %v241 = vld [vmem:[#allocation5] sm:$0x3]
    %v242 = vld [vmem:[#allocation5 + $0x2] sm:$0x3]
    %v243 = vld [vmem:[#allocation5 + $0x4] sm:$0x3]
    %v244 = vld [vmem:[#allocation5 + $0x6] sm:$0x3]
    %v245 = vld [vmem:[#allocation5 + $0x8] sm:$0x3]
    %v246 = vld [vmem:[#allocation5 + $0xa] sm:$0x3]
    %v247 = vld [vmem:[#allocation5 + $0xc] sm:$0x3]
    %v248 = vld [vmem:[#allocation5 + $0xe] sm:$0x3]
    %v257 = vrot.slane %v234, 7
    %vm258 = vcmask 1041409
    %v259 = vsel %vm258, %v257, %v233
    %v260 = vrot.slane %v235, 6
    %vm261 = vcmask 1042434
    %v262 = vsel %vm261, %v260, %v259
    %v263 = vrot.slane %v236, 5
    %vm264 = vcmask 1043459
    %v265 = vsel %vm264, %v263, %v262
    %v266 = vrot.slane %v237, 4
    %vm267 = vcmask 1044484
    %v268 = vsel %vm267, %v266, %v265
    %v269 = vrot.slane %v238, 3
    %vm270 = vcmask 1045509
    %v271 = vsel %vm270, %v269, %v268
    %v272 = vrot.slane %v239, 2
    %vm273 = vcmask 1046534
    %v274 = vsel %vm273, %v272, %v271
    %v275 = vrot.slane %v240, 1
    %vm276 = vcmask 1047559
    %v277 = vsel %vm276, %v275, %v274
    %v278 = vrot.slane %v233, 1
    %v279 = vsel %vm258, %v234, %v278
    %v280 = vrot.slane %v235, 7
    %v281 = vsel %vm261, %v280, %v279
    %v282 = vrot.slane %v236, 6
    %v283 = vsel %vm264, %v282, %v281
    %v284 = vrot.slane %v237, 5
    %v285 = vsel %vm267, %v284, %v283
    %v286 = vrot.slane %v238, 4
    %v287 = vsel %vm270, %v286, %v285
    %v288 = vrot.slane %v239, 3
    %v289 = vsel %vm273, %v288, %v287
    %v290 = vrot.slane %v240, 2
    %v291 = vsel %vm276, %v290, %v289
    %v300 = vrot.slane %v242, 7
    %v301 = vsel %vm258, %v300, %v241
    %v302 = vrot.slane %v243, 6
    %v303 = vsel %vm261, %v302, %v301
    %v304 = vrot.slane %v244, 5
    %v305 = vsel %vm264, %v304, %v303
    %v306 = vrot.slane %v245, 4
    %v307 = vsel %vm267, %v306, %v305
    %v308 = vrot.slane %v246, 3
    %v309 = vsel %vm270, %v308, %v307
    %v310 = vrot.slane %v247, 2
    %v311 = vsel %vm273, %v310, %v309
    %v312 = vrot.slane %v248, 1
    %v313 = vsel %vm276, %v312, %v311
    %v314 = vrot.slane %v241, 1
    %v315 = vsel %vm258, %v242, %v314
    %v316 = vrot.slane %v243, 7
    %v317 = vsel %vm261, %v316, %v315
    %v318 = vrot.slane %v244, 6
    %v319 = vsel %vm264, %v318, %v317
    %v320 = vrot.slane %v245, 5
    %v321 = vsel %vm267, %v320, %v319
    %v322 = vrot.slane %v246, 4
    %v323 = vsel %vm270, %v322, %v321
    %v324 = vrot.slane %v247, 3
    %v325 = vsel %vm273, %v324, %v323
    %v326 = vrot.slane %v248, 2
    %v327 = vsel %vm276, %v326, %v325
    %v329 = vperm.slane %v202, 0
    %vm331 = vcmask 261120
    %v332 = vsel %vm331, %v277, 0
    %v334 = vsel %vm331, %v291, 0
    %336 = vmatpush.msra.mxu0 0.0
    %337 = vmatpush.msra.mxu0 0.0
    %338 = vmatpush.msra.mxu0 0.0
    %339 = vmatpush.msra.mxu0 0.0
    %340 = vmatpush.msra.mxu0 0.0
    %341 = vmatpush.msra.mxu0 0.0
    %342 = vmatpush.msra.mxu0 0.0
    %343 = vmatpush.msra.mxu0 0.0
    %344 = vmatpush.msra.mxu0 0.0
    %345 = vmatpush.msra.mxu0 0.0
    %346 = vmatpush.msra.mxu0 0.0
    %347 = vmatpush.msra.mxu0 0.0
    %348 = vmatpush.msra.mxu0 %v197
    %349 = vmatpush.msra.mxu0 %v196
    %350 = vmatpush.msra.mxu0 %v195
    %351 = vmatpush.msra.mxu0 %v194
    %352 = vmatmul.f32.gmra.mxu0 %v332
    %v353 = vpop.f32.mrf.mxu0
    %v354 = vadd.f32 %v329, %v353
    %355 = vmatmul.f32.gmra.mxu0 %v334
    %v356 = vpop.f32.mrf.mxu0
    %v357 = vadd.f32 %v329, %v356
    %358 = vdwg.mxu0
    %v360 = vperm.slane %v203, 0
    %v362 = vsel %vm331, %v313, 0
    %v364 = vsel %vm331, %v327, 0
    %366 = vmatpush.msra.mxu0 0.0
    %367 = vmatpush.msra.mxu0 0.0
    %368 = vmatpush.msra.mxu0 0.0
    %369 = vmatpush.msra.mxu0 0.0
    %370 = vmatpush.msra.mxu0 0.0
    %371 = vmatpush.msra.mxu0 0.0
    %372 = vmatpush.msra.mxu0 0.0
    %373 = vmatpush.msra.mxu0 0.0
    %374 = vmatpush.msra.mxu0 0.0
    %375 = vmatpush.msra.mxu0 0.0
    %376 = vmatpush.msra.mxu0 0.0
    %377 = vmatpush.msra.mxu0 0.0
    %378 = vmatpush.msra.mxu0 %v201
    %379 = vmatpush.msra.mxu0 %v200
    %380 = vmatpush.msra.mxu0 %v199
    %381 = vmatpush.msra.mxu0 %v198
    %382 = vmatmul.f32.gmra.mxu0 %v362
    %v383 = vpop.f32.mrf.mxu0
    %v384 = vadd.f32 %v360, %v383
    %385 = vmatmul.f32.gmra.mxu0 %v364
    %v386 = vpop.f32.mrf.mxu0
    %v387 = vadd.f32 %v360, %v386
    %388 = vdwg.mxu0
    %v389 = vmul.f32 %v384, %v209
    %v390 = vmul.f32 %v384, %v210
    %v391 = vmul.f32 %v384, %v211
    %v392 = vmul.f32 %v384, %v212
    %v393 = vmul.f32 %v384, %v213
    %v394 = vmul.f32 %v384, %v214
    %v395 = vmul.f32 %v384, %v215
    %v396 = vmul.f32 %v384, %v216
    %405 = vrot.lane.b32.xlu0 %v209, 32
    %v406 = vpop.permute.xlu0 %405
    %407 = vrot.lane.b32.xlu0 %v210, 32
    %v408 = vpop.permute.xlu0 %407
    %409 = vrot.lane.b32.xlu0 %v211, 32
    %v410 = vpop.permute.xlu0 %409
    %411 = vrot.lane.b32.xlu0 %v212, 32
    %v412 = vpop.permute.xlu0 %411
    %413 = vrot.lane.b32.xlu0 %v213, 32
    %v414 = vpop.permute.xlu0 %413
    %415 = vrot.lane.b32.xlu0 %v214, 32
    %v416 = vpop.permute.xlu0 %415
    %417 = vrot.lane.b32.xlu0 %v215, 32
    %v418 = vpop.permute.xlu0 %417
    %419 = vrot.lane.b32.xlu0 %v216, 32
    %v420 = vpop.permute.xlu0 %419
    %v429 = vmul.f32 %v384, %v406
    %v430 = vmul.f32 %v384, %v408
    %v431 = vmul.f32 %v384, %v410
    %v432 = vmul.f32 %v384, %v412
    %v433 = vmul.f32 %v384, %v414
    %v434 = vmul.f32 %v384, %v416
    %v435 = vmul.f32 %v384, %v418
    %v436 = vmul.f32 %v384, %v420
    %v438 = vsel %vm331, %v354, 0
    %v441 = vsel %vm331, %v389, 0
    %v444 = vsel %vm331, %v390, 0
    %v447 = vsel %vm331, %v391, 0
    %v450 = vsel %vm331, %v392, 0
    %v453 = vsel %vm331, %v393, 0
    %v456 = vsel %vm331, %v394, 0
    %v459 = vsel %vm331, %v395, 0
    %v462 = vsel %vm331, %v396, 0
    %464 = vmatpush.xpose.msra.mxu0 0.0
    %465 = vmatpush.xpose.msra.mxu0 0.0
    %466 = vmatpush.xpose.msra.mxu0 0.0
    %467 = vmatpush.xpose.msra.mxu0 0.0
    %468 = vmatpush.xpose.msra.mxu0 0.0
    %469 = vmatpush.xpose.msra.mxu0 0.0
    %470 = vmatpush.xpose.msra.mxu0 0.0
    %471 = vmatpush.xpose.msra.mxu0 0.0
    %472 = vmatpush.xpose.msra.mxu0 %v462
    %473 = vmatpush.xpose.msra.mxu0 %v459
    %474 = vmatpush.xpose.msra.mxu0 %v456
    %475 = vmatpush.xpose.msra.mxu0 %v453
    %476 = vmatpush.xpose.msra.mxu0 %v450
    %477 = vmatpush.xpose.msra.mxu0 %v447
    %478 = vmatpush.xpose.msra.mxu0 %v444
    %479 = vmatpush.xpose.msra.mxu0 %v441
    %480 = vmatmul.f32.gmra.mxu0 %v438
    %v481 = vpop.f32.mrf.mxu0
    %v482 = vadd.f32 0.0, %v481
    %483 = vdwg.mxu0
    %vm484 = vcmask 523264
    %v485 = vsel %vm484, %v482, -inf
    %486 = vmax.xlane.f32.xlu0 %v485
    %v487 = vpop.xlane.xlu0 %486
    %v488 = vsub.f32 %v482, %v487
    %v489 = vmul.f32 %v488, 1.442695
    %v490 = vpow.pop %v489
    %v492 = vsel %vm484, %v490, 0
    %494 = vmatpush.msra.mxu0 0.0
    %495 = vmatpush.msra.mxu0 0.0
    %496 = vmatpush.msra.mxu0 0.0
    %497 = vmatpush.msra.mxu0 0.0
    %498 = vmatpush.msra.mxu0 0.0
    %499 = vmatpush.msra.mxu0 0.0
    %500 = vmatpush.msra.mxu0 0.0
    %501 = vmatpush.msra.mxu0 0.0
    %502 = vmatpush.msra.mxu0 %v224
    %503 = vmatpush.msra.mxu0 %v223
    %504 = vmatpush.msra.mxu0 %v222
    %505 = vmatpush.msra.mxu0 %v221
    %506 = vmatpush.msra.mxu0 %v220
    %507 = vmatpush.msra.mxu0 %v219
    %508 = vmatpush.msra.mxu0 %v218
    %509 = vmatpush.msra.mxu0 %v217
    %510 = vmatmul.f32.gmra.mxu0 %v492
    %v511 = vpop.f32.mrf.mxu0
    %v512 = vadd.f32 0.0, %v511
    %513 = vdwg.mxu0
    %v514 = vrcp.pop %v512
    %v515 = vmul.f32 %v512, %v514
    %v516 = vsub.f32 1.0, %v515
    %v517 = vmul.f32 %v514, %v516
    %v518 = vadd.f32 %v514, %v517
    %vm519 = vweird.f32 %v512
    %vm520 = vweird.f32 %v514
    %vm521 = vmor %vm519, %vm520
    %v522 = vsel %vm521, %v514, %v518
    %v523 = vand.u32 2147483647, %v512
    %vm524 = vcmp.eq.f32.partialorder %v523, 8.507059e+37
    %v525 = vand.u32 %v512, 2147483648
    %v526 = vor.u32 1.1754944e-38, %v525
    %v527 = vsel %vm524, %v526, %v522
    %v528 = vmul.f32 %v490, %v527
    %537 = vrot.lane.b32.xlu0 %v429, 96
    %v538 = vpop.permute.xlu0 %537
    %539 = vrot.lane.b32.xlu0 %v430, 96
    %v540 = vpop.permute.xlu0 %539
    %541 = vrot.lane.b32.xlu0 %v431, 96
    %v542 = vpop.permute.xlu0 %541
    %543 = vrot.lane.b32.xlu0 %v432, 96
    %v544 = vpop.permute.xlu0 %543
    %545 = vrot.lane.b32.xlu0 %v433, 96
    %v546 = vpop.permute.xlu0 %545
    %547 = vrot.lane.b32.xlu0 %v434, 96
    %v548 = vpop.permute.xlu0 %547
    %549 = vrot.lane.b32.xlu0 %v435, 96
    %v550 = vpop.permute.xlu0 %549
    %551 = vrot.lane.b32.xlu0 %v436, 96
    %v552 = vpop.permute.xlu0 %551
    %v562 = vsel %vm484, %v528, 0
    %564 = vmatpush.msra.mxu0 0.0
    %565 = vmatpush.msra.mxu0 0.0
    %566 = vmatpush.msra.mxu0 0.0
    %567 = vmatpush.msra.mxu0 0.0
    %568 = vmatpush.msra.mxu0 0.0
    %569 = vmatpush.msra.mxu0 0.0
    %570 = vmatpush.msra.mxu0 0.0
    %571 = vmatpush.msra.mxu0 0.0
    %572 = vmatpush.msra.mxu0 %v552
    %573 = vmatpush.msra.mxu0 %v550
    %574 = vmatpush.msra.mxu0 %v548
    %575 = vmatpush.msra.mxu0 %v546
    %576 = vmatpush.msra.mxu0 %v544
    %577 = vmatpush.msra.mxu0 %v542
    %578 = vmatpush.msra.mxu0 %v540
    %579 = vmatpush.msra.mxu0 %v538
    %580 = vmatmul.f32.gmra.mxu0 %v562
    %v581 = vpop.f32.mrf.mxu0
    %v582 = vadd.f32 0.0, %v581
    %583 = vdwg.mxu0
    %584 = vmatpush.msra.mxu0 0.0
    %585 = vmatpush.msra.mxu0 0.0
    %586 = vmatpush.msra.mxu0 0.0
    %587 = vmatpush.msra.mxu0 0.0
    %588 = vmatpush.msra.mxu0 0.0
    %589 = vmatpush.msra.mxu0 0.0
    %590 = vmatpush.msra.mxu0 0.0
    %591 = vmatpush.msra.mxu0 0.0
    %592 = vmatpush.msra.mxu0 %v232
    %593 = vmatpush.msra.mxu0 %v231
    %594 = vmatpush.msra.mxu0 %v230
    %595 = vmatpush.msra.mxu0 %v229
    %596 = vmatpush.msra.mxu0 %v228
    %597 = vmatpush.msra.mxu0 %v227
    %598 = vmatpush.msra.mxu0 %v226
    %599 = vmatpush.msra.mxu0 %v225
    %600 = vmatmul.f32.gmra.mxu0 %v562
    %v601 = vpop.f32.mrf.mxu0
    %v602 = vadd.f32 0.0, %v601
    %603 = vdwg.mxu0
    %v604 = vmul.f32 %v387, %v209
    %v605 = vmul.f32 %v387, %v210
    %v606 = vmul.f32 %v387, %v211
    %v607 = vmul.f32 %v387, %v212
    %v608 = vmul.f32 %v387, %v213
    %v609 = vmul.f32 %v387, %v214
    %v610 = vmul.f32 %v387, %v215
    %v611 = vmul.f32 %v387, %v216
    %v612 = vmul.f32 %v387, %v406
    %v613 = vmul.f32 %v387, %v408
    %v614 = vmul.f32 %v387, %v410
    %v615 = vmul.f32 %v387, %v412
    %v616 = vmul.f32 %v387, %v414
    %v617 = vmul.f32 %v387, %v416
    %v618 = vmul.f32 %v387, %v418
    %v619 = vmul.f32 %v387, %v420
    %v621 = vsel %vm331, %v357, 0
    %v624 = vsel %vm331, %v604, 0
    %v627 = vsel %vm331, %v605, 0
    %v630 = vsel %vm331, %v606, 0
    %v633 = vsel %vm331, %v607, 0
    %v636 = vsel %vm331, %v608, 0
    %v639 = vsel %vm331, %v609, 0
    %v642 = vsel %vm331, %v610, 0
    %v645 = vsel %vm331, %v611, 0
    %647 = vmatpush.xpose.msra.mxu0 0.0
    %648 = vmatpush.xpose.msra.mxu0 0.0
    %649 = vmatpush.xpose.msra.mxu0 0.0
    %650 = vmatpush.xpose.msra.mxu0 0.0
    %651 = vmatpush.xpose.msra.mxu0 0.0
    %652 = vmatpush.xpose.msra.mxu0 0.0
    %653 = vmatpush.xpose.msra.mxu0 0.0
    %654 = vmatpush.xpose.msra.mxu0 0.0
    %655 = vmatpush.xpose.msra.mxu0 %v645
    %656 = vmatpush.xpose.msra.mxu0 %v642
    %657 = vmatpush.xpose.msra.mxu0 %v639
    %658 = vmatpush.xpose.msra.mxu0 %v636
    %659 = vmatpush.xpose.msra.mxu0 %v633
    %660 = vmatpush.xpose.msra.mxu0 %v630
    %661 = vmatpush.xpose.msra.mxu0 %v627
    %662 = vmatpush.xpose.msra.mxu0 %v624
    %663 = vmatmul.f32.gmra.mxu0 %v621
    %v664 = vpop.f32.mrf.mxu0
    %v665 = vadd.f32 0.0, %v664
    %666 = vdwg.mxu0
    %v667 = vsel %vm484, %v665, -inf
    %668 = vmax.xlane.f32.xlu0 %v667
    %v669 = vpop.xlane.xlu0 %668
    %v670 = vsub.f32 %v665, %v669
    %v671 = vmul.f32 %v670, 1.442695
    %v672 = vpow.pop %v671
    %v674 = vsel %vm484, %v672, 0
    %676 = vmatpush.msra.mxu0 0.0
    %677 = vmatpush.msra.mxu0 0.0
    %678 = vmatpush.msra.mxu0 0.0
    %679 = vmatpush.msra.mxu0 0.0
    %680 = vmatpush.msra.mxu0 0.0
    %681 = vmatpush.msra.mxu0 0.0
    %682 = vmatpush.msra.mxu0 0.0
    %683 = vmatpush.msra.mxu0 0.0
    %684 = vmatpush.msra.mxu0 %v224
    %685 = vmatpush.msra.mxu0 %v223
    %686 = vmatpush.msra.mxu0 %v222
    %687 = vmatpush.msra.mxu0 %v221
    %688 = vmatpush.msra.mxu0 %v220
    %689 = vmatpush.msra.mxu0 %v219
    %690 = vmatpush.msra.mxu0 %v218
    %691 = vmatpush.msra.mxu0 %v217
    %692 = vmatmul.f32.gmra.mxu0 %v674
    %v693 = vpop.f32.mrf.mxu0
    %v694 = vadd.f32 0.0, %v693
    %695 = vdwg.mxu0
    %v696 = vrcp.pop %v694
    %v697 = vmul.f32 %v694, %v696
    %v698 = vsub.f32 1.0, %v697
    %v699 = vmul.f32 %v696, %v698
    %v700 = vadd.f32 %v696, %v699
    %vm701 = vweird.f32 %v694
    %vm702 = vweird.f32 %v696
    %vm703 = vmor %vm701, %vm702
    %v704 = vsel %vm703, %v696, %v700
    %v705 = vand.u32 2147483647, %v694
    %vm706 = vcmp.eq.f32.partialorder %v705, 8.507059e+37
    %v707 = vand.u32 %v694, 2147483648
    %v708 = vor.u32 1.1754944e-38, %v707
    %v709 = vsel %vm706, %v708, %v704
    %v710 = vmul.f32 %v672, %v709
    %719 = vrot.lane.b32.xlu0 %v612, 96
    %v720 = vpop.permute.xlu0 %719
    %721 = vrot.lane.b32.xlu0 %v613, 96
    %v722 = vpop.permute.xlu0 %721
    %723 = vrot.lane.b32.xlu0 %v614, 96
    %v724 = vpop.permute.xlu0 %723
    %725 = vrot.lane.b32.xlu0 %v615, 96
    %v726 = vpop.permute.xlu0 %725
    %727 = vrot.lane.b32.xlu0 %v616, 96
    %v728 = vpop.permute.xlu0 %727
    %729 = vrot.lane.b32.xlu0 %v617, 96
    %v730 = vpop.permute.xlu0 %729
    %731 = vrot.lane.b32.xlu0 %v618, 96
    %v732 = vpop.permute.xlu0 %731
    %733 = vrot.lane.b32.xlu0 %v619, 96
    %v734 = vpop.permute.xlu0 %733
    %v744 = vsel %vm484, %v710, 0
    %746 = vmatpush.msra.mxu0 0.0
    %747 = vmatpush.msra.mxu0 0.0
    %748 = vmatpush.msra.mxu0 0.0
    %749 = vmatpush.msra.mxu0 0.0
    %750 = vmatpush.msra.mxu0 0.0
    %751 = vmatpush.msra.mxu0 0.0
    %752 = vmatpush.msra.mxu0 0.0
    %753 = vmatpush.msra.mxu0 0.0
    %754 = vmatpush.msra.mxu0 %v734
    %755 = vmatpush.msra.mxu0 %v732
    %756 = vmatpush.msra.mxu0 %v730
    %757 = vmatpush.msra.mxu0 %v728
    %758 = vmatpush.msra.mxu0 %v726
    %759 = vmatpush.msra.mxu0 %v724
    %760 = vmatpush.msra.mxu0 %v722
    %761 = vmatpush.msra.mxu0 %v720
    %762 = vmatmul.f32.gmra.mxu0 %v744
    %v763 = vpop.f32.mrf.mxu0
    %v764 = vadd.f32 0.0, %v763
    %765 = vdwg.mxu0
    %766 = vmatpush.msra.mxu0 0.0
    %767 = vmatpush.msra.mxu0 0.0
    %768 = vmatpush.msra.mxu0 0.0
    %769 = vmatpush.msra.mxu0 0.0
    %770 = vmatpush.msra.mxu0 0.0
    %771 = vmatpush.msra.mxu0 0.0
    %772 = vmatpush.msra.mxu0 0.0
    %773 = vmatpush.msra.mxu0 0.0
    %774 = vmatpush.msra.mxu0 %v232
    %775 = vmatpush.msra.mxu0 %v231
    %776 = vmatpush.msra.mxu0 %v230
    %777 = vmatpush.msra.mxu0 %v229
    %778 = vmatpush.msra.mxu0 %v228
    %779 = vmatpush.msra.mxu0 %v227
    %780 = vmatpush.msra.mxu0 %v226
    %781 = vmatpush.msra.mxu0 %v225
    %782 = vmatmul.f32.gmra.mxu0 %v744
    %v783 = vpop.f32.mrf.mxu0
    %v784 = vadd.f32 0.0, %v783
    %785 = vdwg.mxu0
    %v787 = vperm.slane %v208, 0
    %v790 = vsel %vm331, %v582, 0
    %v793 = vsel %vm331, %v764, 0
    %795 = vmatpush.msra.mxu0 0.0
    %796 = vmatpush.msra.mxu0 0.0
    %797 = vmatpush.msra.mxu0 0.0
    %798 = vmatpush.msra.mxu0 0.0
    %799 = vmatpush.msra.mxu0 0.0
    %800 = vmatpush.msra.mxu0 0.0
    %801 = vmatpush.msra.mxu0 0.0
    %802 = vmatpush.msra.mxu0 0.0
    %803 = vmatpush.msra.mxu0 0.0
    %804 = vmatpush.msra.mxu0 0.0
    %805 = vmatpush.msra.mxu0 0.0
    %806 = vmatpush.msra.mxu0 0.0
    %807 = vmatpush.msra.mxu0 %v207
    %808 = vmatpush.msra.mxu0 %v206
    %809 = vmatpush.msra.mxu0 %v205
    %810 = vmatpush.msra.mxu0 %v204
    %811 = vmatmul.f32.gmra.mxu0 %v790
    %v812 = vpop.f32.mrf.mxu0
    %v813 = vadd.f32 %v787, %v812
    %814 = vmatmul.f32.gmra.mxu0 %v793
    %v815 = vpop.f32.mrf.mxu0
    %v816 = vadd.f32 %v787, %v815
    %817 = vdwg.mxu0
    %v819 = vrot.slane %v813, 1
    %v820 = vrot.slane %v813, 2
    %v821 = vrot.slane %v813, 3
    %v822 = vrot.slane %v813, 4
    %v823 = vrot.slane %v813, 5
    %v824 = vrot.slane %v813, 6
    %v825 = vrot.slane %v813, 7
    %v834 = vrot.slane %v816, 1
    %v835 = vrot.slane %v816, 2
    %v836 = vrot.slane %v816, 3
    %v837 = vrot.slane %v816, 4
    %v838 = vrot.slane %v816, 5
    %v839 = vrot.slane %v816, 6
    %v840 = vrot.slane %v816, 7
    %v841 = vperm.slane %v816, 0
    %v842 = vperm.slane %v834, 0
    %v843 = vperm.slane %v835, 0
    %v844 = vperm.slane %v836, 0
    %v845 = vperm.slane %v837, 0
    %v846 = vperm.slane %v838, 0
    %v847 = vperm.slane %v839, 0
    %v848 = vperm.slane %v840, 0
    %vm857 = vcmask 1040384
    %v858 = vsel %vm857, %v813, %v841
    %v859 = vsel %vm857, %v819, %v842
    %v860 = vsel %vm857, %v820, %v843
    %v861 = vsel %vm857, %v821, %v844
    %v862 = vsel %vm857, %v822, %v845
    %v863 = vsel %vm857, %v823, %v846
    %v864 = vsel %vm857, %v824, %v847
    %v865 = vsel %vm857, %v825, %v848
    %vm866 = vcmask 254976
    %867 = vst.msk [vmem:[#allocation19] sm:$0x3] %vm866, %v858
    %868 = vst.msk [vmem:[#allocation19 + $0x2] sm:$0x3] %vm866, %v859
    %869 = vst.msk [vmem:[#allocation19 + $0x4] sm:$0x3] %vm866, %v860
    %870 = vst.msk [vmem:[#allocation19 + $0x6] sm:$0x3] %vm866, %v861
    %871 = vst.msk [vmem:[#allocation19 + $0x8] sm:$0x3] %vm866, %v862
    %872 = vst.msk [vmem:[#allocation19 + $0xa] sm:$0x3] %vm866, %v863
    %873 = vst.msk [vmem:[#allocation19 + $0xc] sm:$0x3] %vm866, %v864
    %874 = vst.msk [vmem:[#allocation19 + $0xe] sm:$0x3] %vm866, %v865
    %vm875 = vcmask 64512
    %876 = vst.msk [vmem:[#allocation20] sm:$0xff] %vm875, %v602
    %877 = vst.msk [vmem:[#allocation20 + $0x8] sm:$0xff] %vm875, %v784
    // Predicated region
    $region86: #{model_forward.1} parent=1 // pred_check
      _
    $region87: #{model_forward.1} parent=1 // pred_check_branch
      %879 = sbr.rel (0) target = $region89
    $region88: #{model_forward.1} parent=1 // pred_region
      %881 = vsyncadd [#allocation4], 0
      %s882 = sshll.u32 [#allocation19], 4
      %s883 = int_to_ptr.vmem [resolvable:$true] %s882
      %s884 = sshll.u32 %s11, 4
      %s885 = int_to_ptr.hbm [resolvable:$true] %s884
      %890 = dma.vmem_to_hbm [thread:$0]  %s883, 256, %s885, [#allocation4], 32, 32, 2
    $region89: #{model_forward.1} parent=1 // pred_fallthru
      _
    // Predicated region
    $region90: #{model_forward.1} parent=1 // pred_check
      _
    $region91: #{model_forward.1} parent=1 // pred_check_branch
      %892 = sbr.rel (0) target = $region93
    $region92: #{model_forward.1} parent=1 // pred_region
      %894 = vsyncadd [#allocation21], 0
      %s895 = sshll.u32 [#allocation20], 4
      %s896 = int_to_ptr.vmem [resolvable:$true] %s895
      %s897 = sshll.u32 %s12, 4
      %s898 = int_to_ptr.hbm [resolvable:$true] %s897
      %903 = dma.vmem_to_hbm [thread:$0]  %s896, 256, %s898, [#allocation21], 128, 128, 8
    $region93: #{model_forward.1} parent=1 // pred_fallthru
      _
    // Predicated region
    $region94: #{model_forward.1} parent=1 // pred_check
      _
    $region95: #{model_forward.1} parent=1 // pred_check_branch
      %905 = sbr.rel (0) target = $region97
    $region96: #{model_forward.1} parent=1 // pred_region
      %907 = dma.done [#allocation4], 256
    $region97: #{model_forward.1} parent=1 // pred_fallthru
      _
    // Predicated region
    $region98: #{model_forward.1} parent=1 // pred_check
      _
    $region99: #{model_forward.1} parent=1 // pred_check_branch
      %909 = sbr.rel (0) target = $region101
    $region100: #{model_forward.1} parent=1 // pred_region
      %911 = dma.done [#allocation21], 256
    $region101: #{model_forward.1} parent=1 // pred_fallthru
      _
    %912 = vsyncpa [#allocation3], 1
    %913 = vsyncpa [#allocation6], 1
    %914 = vsyncpa [#allocation9], 1
    %915 = vsyncpa [#allocation12], 1
    %916 = vsyncpa [#allocation15], 1
    %917 = vsyncpa [#allocation18], 1
    %918 = vsyncpa [#allocation4], 1
    %919 = vsyncpa [#allocation21], 1

</llo_original>
